<compile_context>
chip_gen: v6e
topology: v6e:2x2x1
jax: 0.10.0
libtpu: 0.0.40
codegen_flags: <defaults>
</compile_context>

<pallas_src>
import math
from functools import partial

import jax
import jax.numpy as jnp
from jax.experimental import pallas as pl
from jax.experimental.pallas import tpu as pltpu


def _round_up(x, m):
    return ((x + m - 1) // m) * m


def _vmem_budget_bytes():
    """Per-generation VMEM budget (v5e/v6e: 128 MiB, v7x: 64 MiB physical)."""
    try:
        cap = int(pltpu.get_tpu_info().vmem_capacity_bytes)
    except Exception:
        cap = 64 * 1024 * 1024  # conservative (v7x-sized) fallback
    # Leave headroom for compiler-internal scratch.
    return min(cap * 3 // 4, 96 * 1024 * 1024)


def _footprint_bytes(tm, tk, tn, k_pad, x_isz, w_isz):
    """Double-buffered VMEM footprint of one grid step."""
    x_bytes = 2 * tm * k_pad * x_isz      # full-K resident x (2 buffers)
    w_bytes = 2 * tk * tn * w_isz
    b_bytes = 2 * 8 * tn * 4              # (1, tn) block occupies 8 sublanes
    o_bytes = 2 * tm * tn * 4             # f32 output / accumulator
    return x_bytes + w_bytes + b_bytes + o_bytes


def _choose_tiles(tm, k_pad, n_pad, budget, x_isz, w_isz, m_tiles):
    """Pick (tk, tn).  Prefer a single K step; keep >=2 N blocks when the M
    axis has only one block so v7x's two TensorCores both get work."""
    tn_cands = [c for c in (1024, 768, 512, 384, 256, 128) if n_pad % c == 0]
    if not tn_cands:
        tn_cands = [n_pad]
    if m_tiles == 1:
        pref = [c for c in tn_cands if n_pad // c >= 2]
        if pref:
            tn_cands = pref + [c for c in tn_cands if c not in pref]

    for tn in tn_cands:
        tk_cands = [k_pad] + [c for c in (2048, 1024, 512, 256, 128)
                              if c < k_pad and k_pad % c == 0]
        for tk in tk_cands:
            if _footprint_bytes(tm, tk, tn, k_pad, x_isz, w_isz) <= budget:
                return tk, tn
    return (128 if k_pad > 128 else k_pad), (128 if n_pad > 128 else n_pad)


def _fc_kernel_single(x_ref, w_ref, b_ref, o_ref):
    """Whole K reduction in one step: out = x @ w + b (no branches)."""
    o_ref[...] = (
        jnp.dot(x_ref[...], w_ref[...], preferred_element_type=jnp.float32)
        + b_ref[...]
    ).astype(o_ref.dtype)


def _fc_kernel_reduce(x_ref, w_ref, b_ref, o_ref, *, tk):
    """K-tiled reduction accumulating directly into the resident f32 o_ref."""
    k = pl.program_id(2)
    k0 = pl.multiple_of(k * tk, 128)
    partial_sum = jnp.dot(
        x_ref[:, pl.ds(k0, tk)], w_ref[...], preferred_element_type=jnp.float32
    )

    @pl.when(k == 0)
    def _():
        # Bias folded into the first partial: added exactly once.
        o_ref[...] = partial_sum + b_ref[...]

    @pl.when(k > 0)
    def _():
        o_ref[...] += partial_sum


def fc_pallas(x_flat, w_pad, b_pad):
    """x_flat: [B, K_pad] (bf16)  w_pad: [K_pad, N_pad] (bf16)  b_pad: [1, N_pad] (f32).

    Returns f32 [B, N_pad].  K_pad and N_pad must be multiples of 128.
    """
    B, K = x_flat.shape
    K2, N = w_pad.shape
    assert K == K2 and K % 128 == 0 and N % 128 == 0

    # M (batch) tiling only kicks in for large batches; a small B keeps a
    # single full-B block (block dim == full array dim is always legal).
    if B > 512:
        tm = 256
        b_padded = _round_up(B, tm)
        if b_padded != B:
            x_flat = jnp.pad(x_flat, ((0, b_padded - B), (0, 0)))
    else:
        tm, b_padded = B, B
    m_tiles = b_padded // tm

    budget = _vmem_budget_bytes()
    x_isz = x_flat.dtype.itemsize
    w_isz = w_pad.dtype.itemsize
    tk, tn = _choose_tiles(tm, K, N, budget, x_isz, w_isz, m_tiles)
    n_tiles, k_tiles = N // tn, K // tk

    footprint = _footprint_bytes(tm, tk, tn, K, x_isz, w_isz)
    vmem_limit = min(max(footprint * 3 // 2 + (2 << 20), 16 << 20), budget)

    cost = pl.CostEstimate(
        flops=2 * b_padded * K * N,
        transcendentals=0,
        bytes_accessed=(x_isz * b_padded * K + w_isz * K * N
                        + 4 * (b_padded * N + N)),
    )

    if k_tiles == 1:
        grid = (m_tiles, n_tiles)
        kernel = _fc_kernel_single
        in_specs = [
            pl.BlockSpec((tm, K), lambda m, n: (m, 0)),
            pl.BlockSpec((K, tn), lambda m, n: (0, n)),
            pl.BlockSpec((1, tn), lambda m, n: (0, n)),
        ]
        out_spec = pl.BlockSpec((tm, tn), lambda m, n: (m, n))
        dims = ("parallel", "parallel")
    else:
        grid = (m_tiles, n_tiles, k_tiles)
        kernel = partial(_fc_kernel_reduce, tk=tk)
        in_specs = [
            # x: full-K block whose index only depends on m -> one DMA per M
            # tile (not per grid step, not per N tile).
            pl.BlockSpec((tm, K), lambda m, n, k: (m, 0)),
            pl.BlockSpec((tk, tn), lambda m, n, k: (k, n)),
            pl.BlockSpec((1, tn), lambda m, n, k: (0, n)),
        ]
        # Same out block across K -> o_ref is the resident f32 accumulator.
        out_spec = pl.BlockSpec((tm, tn), lambda m, n, k: (m, n))
        dims = ("parallel", "parallel", "arbitrary")
        # If the W DMA is still exposed at tiny B, pipeline_mode=pl.Buffered(3)
        # on the weight spec is the next knob (budget the extra tk*tn bytes).

    out = pl.pallas_call(
        kernel,
        out_shape=jax.ShapeDtypeStruct((b_padded, N), jnp.float32),
        grid_spec=pltpu.PrefetchScalarGridSpec(
            num_scalar_prefetch=0,
            grid=grid,
            in_specs=in_specs,
            out_specs=out_spec,
        ),
        compiler_params=pltpu.CompilerParams(
            dimension_semantics=dims,
            vmem_limit_bytes=vmem_limit,
        ),
        cost_estimate=cost,
    )(x_flat, w_pad, b_pad)

    return out[:B] if b_padded != B else out


class FCPallas:
    """JAX/Pallas port of the PyTorch `FC` module (flatten -> Linear -> reshape)."""

    def __init__(self, in_shape, in_ch, out_shape, out_ch, key):
        self.in_ch = in_ch
        self.out_ch = out_ch
        self.in_shape = tuple(in_shape) if isinstance(in_shape, (tuple, list)) else (in_shape,)
        self.out_shape = tuple(out_shape) if isinstance(out_shape, (tuple, list)) else (out_shape,)
        self.in_size = math.prod(self.in_shape)
        self.out_size = math.prod(self.out_shape)

        in_features = self.in_size * self.in_ch
        out_features = self.out_size * self.out_ch
        self.in_features = in_features
        self.out_features = out_features

        # Deterministic init mimicking nn.Linear's U(-1/sqrt(fan_in), ...).
        k_w, k_b = jax.random.split(key)
        bound = 1.0 / math.sqrt(in_features)
        # Stored as [in_features, out_features] (transposed vs torch), f32 master.
        self.w = jax.random.uniform(
            k_w, (in_features, out_features), jnp.float32, -bound, bound
        )
        self.b = jax.random.uniform(k_b, (out_features,), jnp.float32, -bound, bound)

        # Pad once to lane-dense (multiple-of-128) K and N.  Weights are kept
        # in bf16 for streaming (HBM-bound layer); bias/accum stay f32.
        self.k_pad = _round_up(in_features, 128)
        self.n_pad = _round_up(out_features, 128)
        self.w_pad = jnp.pad(
            self.w,
            ((0, self.k_pad - in_features), (0, self.n_pad - out_features)),
        ).astype(jnp.bfloat16)
        self.b_pad = jnp.pad(self.b, (0, self.n_pad - out_features)).reshape(1, self.n_pad)

    def __call__(self, x):
        # x: [B, in_ch, *in_shape]  (NCHW-style, matching the torch module)
        B = x.shape[0]
        x_flat = x.reshape(B, -1)                                   # flatten (glue)
        if self.k_pad != self.in_features:
            x_flat = jnp.pad(x_flat, ((0, 0), (0, self.k_pad - self.in_features)))
        x_flat = x_flat.astype(jnp.bfloat16)                        # halve x DMA bytes
        y_pad = fc_pallas(x_flat, self.w_pad, self.b_pad)           # hot path (Pallas)
        y = y_pad[:, : self.out_features]                           # un-pad (glue)
        return y.reshape((B, self.out_ch) + self.out_shape)         # reshape (glue)


if __name__ == "__main__":
    key = jax.random.PRNGKey(0)
    k_param, k_x = jax.random.split(key)

    # Small shapes consistent with the module's example:
    # In : B x in_ch x H x W = 2 x 4 x 16 x 16   (in_features = 1024)
    # Out: B x out_ch x out  = 2 x 3 x 136       (out_features = 408 -> padded 512)
    B, in_ch, H, W = 2, 4, 16, 16
    out_ch, out_len = 3, 136

    model = FCPallas(in_shape=(H, W), in_ch=in_ch,
                     out_shape=(out_len,), out_ch=out_ch, key=k_param)

    x = jax.random.normal(k_x, (B, in_ch, H, W), jnp.float32)

    y = jax.block_until_ready(model(x))
    assert y.shape == (B, out_ch, out_len), y.shape

    x_flat = x.reshape(B, -1)
    # Reference matching the kernel's bf16 streaming + f32 accumulation.
    ref_bf16 = (
        x_flat.astype(jnp.bfloat16).astype(jnp.float32)
        @ model.w.astype(jnp.bfloat16).astype(jnp.float32)
        + model.b
    ).reshape(B, out_ch, out_len)
    assert jnp.allclose(y, ref_bf16, atol=2e-3, rtol=2e-3), float(
        jnp.max(jnp.abs(y - ref_bf16))
    )

    # Full-f32 (torch-equivalent) reference: bf16 weight streaming keeps the
    # error at the ~1e-2 level accepted by the perf review.
    ref_f32 = (x_flat @ model.w + model.b).reshape(B, out_ch, out_len)
    assert float(jnp.max(jnp.abs(y - ref_f32))) < 5e-2

    print("KERNEL_OK")
</pallas_src>

<mosaic_0001>
module attributes {stable_mosaic.version = 11 : i64} {
  func.func @_fc_kernel_single(%arg0: i32, %arg1: i32, %arg2: memref<2x1024xbf16, #tpu.memory_space<vmem>>, %arg3: memref<1024x256xbf16, #tpu.memory_space<vmem>>, %arg4: memref<1x256xf32, #tpu.memory_space<vmem>>, %arg5: memref<2x256xf32, #tpu.memory_space<vmem>>) attributes {dimension_semantics = [#tpu.dimension_semantics<parallel>, #tpu.dimension_semantics<parallel>], iteration_bounds = array<i64: 1, 2>, scalar_prefetch = 0 : i64, scratch_operands = 0 : i64, tpu.core_type = #tpu.core_type<tc>, window_params = [{transform_indices = @transform_0, window_bounds = array<i64: 2, 1024>}, {transform_indices = @transform_1, window_bounds = array<i64: 1024, 256>}, {transform_indices = @transform_2, window_bounds = array<i64: 1, 256>}, {transform_indices = @transform_3, window_bounds = array<i64: 2, 256>}]} {
    %c0 = arith.constant 0 : index
    %c0_0 = arith.constant 0 : index
    %0 = vector.load %arg2[%c0, %c0_0] : memref<2x1024xbf16, #tpu.memory_space<vmem>>, vector<2x1024xbf16>
    %c0_1 = arith.constant 0 : index
    %c0_2 = arith.constant 0 : index
    %1 = vector.load %arg3[%c0_1, %c0_2] : memref<1024x256xbf16, #tpu.memory_space<vmem>>, vector<1024x256xbf16>
    %cst = arith.constant dense<0.000000e+00> : vector<2x256xf32>
    %2 = tpu.matmul %0, %1, %cst {dimension_numbers = #tpu.dot_dimension_numbers<[1], [0], [0], [1], [0, 0, 1, 1], [], []>} : vector<2x1024xbf16>, vector<1024x256xbf16>, vector<2x256xf32> -> vector<2x256xf32>
    %c0_3 = arith.constant 0 : index
    %c0_4 = arith.constant 0 : index
    %3 = vector.load %arg4[%c0_3, %c0_4] : memref<1x256xf32, #tpu.memory_space<vmem>>, vector<1x256xf32>
    %4 = vector.broadcast %3 : vector<1x256xf32> to vector<2x256xf32>
    %5 = arith.addf %2, %4 : vector<2x256xf32>
    %c0_5 = arith.constant 0 : index
    %c0_6 = arith.constant 0 : index
    %6 = vector.load %arg5[%c0_5, %c0_6] : memref<2x256xf32, #tpu.memory_space<vmem>>, vector<2x256xf32>
    tpu.vector_store %arg5[%c0_5, %c0_6], %5 {strides = array<i32>} : memref<2x256xf32, #tpu.memory_space<vmem>>, vector<2x256xf32>,
    return
  }
  func.func @transform_0(%arg0: i32, %arg1: i32) -> (i32, i32) {
    %c0_i32 = arith.constant 0 : i32
    %c0_i32_0 = arith.constant 0 : i32
    return %arg0, %c0_i32 : i32, i32
  }
  func.func @transform_1(%arg0: i32, %arg1: i32) -> (i32, i32) {
    %c0_i32 = arith.constant 0 : i32
    %c0_i32_0 = arith.constant 0 : i32
    return %c0_i32, %arg1 : i32, i32
  }
  func.func @transform_2(%arg0: i32, %arg1: i32) -> (i32, i32) {
    %c0_i32 = arith.constant 0 : i32
    %c0_i32_0 = arith.constant 0 : i32
    return %c0_i32, %arg1 : i32, i32
  }
  func.func @transform_3(%arg0: i32, %arg1: i32) -> (i32, i32) {
    %c0_i32 = arith.constant 0 : i32
    return %arg0, %arg1 : i32, i32
  }
}

</mosaic_0001>

<llo_original>
// kernel: tpu_custom_call.1
$region0: #{tpu_custom_call.1}
  #allocation0 [shape = 'u32[]', space=smem, size = 0x4, offset = 0x4, fixed_abs, tag = 'smem constant byte address 0x4 - core index']
  #allocation1 [shape = 'u32[144,128]{1,0:T(1,128)}', space=vmem, size = 0x12000, scoped, tag = 'internal scratch']
  %s0 = inlined_call_operand.hbm [shape: bf16[2,1024], index: 0, kind: input, shape index: {}]
  %s1 = inlined_call_operand.hbm [shape: bf16[1024,512], index: 1, kind: input, shape index: {}]
  %s2 = inlined_call_operand.hbm [shape: f32[1,512], index: 2, kind: input, shape index: {}]
  %s3 = inlined_call_operand.hbm [shape: f32[2,512], index: 3, kind: output, shape index: {}]
  %s4 = sld [smem:[#allocation0]]
  $region57: #{tpu_custom_call.1} parent=0
    _
  %s6 = ssub.s32 1, %s4
  %s7 = scalar_select 0, %s6, %s4
  $region1: #{tpu_custom_call.1} parent=0
    #allocation2 [shape = 'u8[4096]{0}', space=vmem, size = 0x1000, scoped, tag = 'input window, operand 0, single buffered']
    #allocation3 [shape = 's32[2]{0}', space=sflag, size = 0x8, scoped, tag = 'scoped memory for tpu_custom_call.1']
    #allocation4 [shape = 's32[2]{0}', space=sflag, size = 0x8, scoped, tag = 'scoped memory for tpu_custom_call.1']
    #allocation5 [shape = 'u8[1048576]{0}', space=vmem, size = 0x100000, scoped, tag = 'input window, operand 1']
    #allocation6 [shape = 's32[2]{0}', space=sflag, size = 0x8, scoped, tag = 'scoped memory for tpu_custom_call.1']
    #allocation7 [shape = 'u8[2048]{0}', space=vmem, size = 0x800, scoped, tag = 'input window, operand 2']
    #allocation8 [shape = 'u8[4096]{0}', space=vmem, size = 0x1000, scoped, tag = 'output window, operand 0']
    %8 = vsyncpa [#allocation3], 0
    %9 = vsyncpa [#allocation6], 0
    %s10 = scalar_lea.sflag [#allocation6], 1
    %11 = vsyncpa %s10, 0
    %12 = vsyncpa [#allocation4], 0
    %s13 = scalar_lea.sflag [#allocation4], 1
    %14 = vsyncpa %s13, 0
    loop: start=0, step=1, limit=4
    $region2: #{tpu_custom_call.1} parent=1 // loop_pre_header
      _
    $region3: #{tpu_custom_call.1} parent=1 // loop_header
      %s16 = sphi 0, %s20
      %p17 = scmp.ge.s32.totalorder %s16, 4
      %s23 = sphi 0, %s35
      %s24 = sphi 0, %s31
      %s25 = sphi 0, %s23
      %s26 = sphi 0, %s24
      %s27 = sphi 0, %s25
      %s28 = sphi 0, %s26
      %s38 = sphi 0, %s40
      %s41 = sphi 0, %s38
      %s42 = sphi 0, %s41
      %s58 = sphi 0, %s42
      %s64 = sphi 0, %s66
      %s67 = sphi 0, %s64
      %s68 = sphi 0, %s67
      %s84 = sphi 0, %s68
      %s90 = sphi 0, %s92
      %s93 = sphi 0, %s90
      %s94 = sphi 0, %s93
      %s110 = sphi 0, %s94
      %s118 = sphi 0, %s120
      %s121 = sphi 0, %s118
      %s122 = sphi 0, %s121
      %s138 = sphi 0, %s122
    $region4: #{tpu_custom_call.1} parent=1 // loop_header_branch
      %19 = sbr.rel (%p17) target = $region8
    $region5: #{tpu_custom_call.1} parent=1 // loop_body
      %s21 = ssub.s32 %s16, 1
      %s22 = ssub.s32 %s16, 2
      %s29 = sadd.s32 1, %s24
      %p30 = scmp.ge.s32.totalorder %s29, 2
      %s31 = scalar_select %p30, 0, %s29
      %s32 = sadd.s32 1, %s23
      %s33 = scalar_select %p30, %s32, %s23
      %p34 = scmp.ge.s32.totalorder %s33, 1
      %s35 = scalar_select %p34, 0, %s33
      %s36 = ssub.s32 %s23, %s35
      %p37 = scmp.eq.s32.totalorder %s36, 0
      %s39 = sadd.s32 %s38, 1
      %s40 = scalar_select %p37, %s38, %s39
      %p43 = pneg %p37
      %p44 = scmp.eq.s32.totalorder %s16, 1
      %p45 = por %p43, %p44
      %p46 = scmp.ne.s32.totalorder %s38, %s41
      %p47 = scmp.eq.s32.totalorder %s16, 0
      %p48 = por %p46, %p47
      %p49 = scmp.ne.s32.totalorder %s38, %s41
      %p50 = scmp.eq.s32.totalorder %s21, 1
      %p51 = por %p49, %p50
      %p52 = scmp.ne.s32.totalorder %s41, %s42
      %p53 = scmp.eq.s32.totalorder %s21, 0
      %p54 = por %p52, %p53
      %p55 = scmp.ne.s32.totalorder %s41, %s42
      %p56 = scmp.eq.s32.totalorder %s22, 1
      %p57 = por %p55, %p56
      %p59 = scmp.ne.s32.totalorder %s42, %s58
      %p60 = scmp.eq.s32.totalorder %s22, 0
      %p61 = por %p59, %p60
      %s62 = ssub.s32 %s24, %s31
      %p63 = scmp.eq.s32.totalorder %s62, 0
      %s65 = sadd.s32 %s64, 1
      %s66 = scalar_select %p63, %s64, %s65
      %p69 = pneg %p63
      %p70 = scmp.eq.s32.totalorder %s16, 1
      %p71 = por %p69, %p70
      %p72 = scmp.ne.s32.totalorder %s64, %s67
      %p73 = scmp.eq.s32.totalorder %s16, 0
      %p74 = por %p72, %p73
      %p75 = scmp.ne.s32.totalorder %s64, %s67
      %p76 = scmp.eq.s32.totalorder %s21, 1
      %p77 = por %p75, %p76
      %p78 = scmp.ne.s32.totalorder %s67, %s68
      %p79 = scmp.eq.s32.totalorder %s21, 0
      %p80 = por %p78, %p79
      %p81 = scmp.ne.s32.totalorder %s67, %s68
      %p82 = scmp.eq.s32.totalorder %s22, 1
      %p83 = por %p81, %p82
      %p85 = scmp.ne.s32.totalorder %s68, %s84
      %p86 = scmp.eq.s32.totalorder %s22, 0
      %p87 = por %p85, %p86
      %s88 = ssub.s32 %s24, %s31
      %p89 = scmp.eq.s32.totalorder %s88, 0
      %s91 = sadd.s32 %s90, 1
      %s92 = scalar_select %p89, %s90, %s91
      %p95 = pneg %p89
      %p96 = scmp.eq.s32.totalorder %s16, 1
      %p97 = por %p95, %p96
      %p98 = scmp.ne.s32.totalorder %s90, %s93
      %p99 = scmp.eq.s32.totalorder %s16, 0
      %p100 = por %p98, %p99
      %p101 = scmp.ne.s32.totalorder %s90, %s93
      %p102 = scmp.eq.s32.totalorder %s21, 1
      %p103 = por %p101, %p102
      %p104 = scmp.ne.s32.totalorder %s93, %s94
      %p105 = scmp.eq.s32.totalorder %s21, 0
      %p106 = por %p104, %p105
      %p107 = scmp.ne.s32.totalorder %s93, %s94
      %p108 = scmp.eq.s32.totalorder %s22, 1
      %p109 = por %p107, %p108
      %p111 = scmp.ne.s32.totalorder %s94, %s110
      %p112 = scmp.eq.s32.totalorder %s22, 0
      %p113 = por %p111, %p112
      %s114 = ssub.s32 %s23, %s35
      %s115 = ssub.s32 %s24, %s31
      %s116 = sor.u32 %s114, %s115
      %p117 = scmp.eq.s32.totalorder %s116, 0
      %s119 = sadd.s32 %s118, 1
      %s120 = scalar_select %p117, %s118, %s119
      %p123 = pneg %p117
      %p124 = scmp.eq.s32.totalorder %s16, 1
      %p125 = por %p123, %p124
      %p126 = scmp.ne.s32.totalorder %s118, %s121
      %p127 = scmp.eq.s32.totalorder %s16, 0
      %p128 = por %p126, %p127
      %p129 = scmp.ne.s32.totalorder %s118, %s121
      %p130 = scmp.eq.s32.totalorder %s21, 1
      %p131 = por %p129, %p130
      %p132 = scmp.ne.s32.totalorder %s121, %s122
      %p133 = scmp.eq.s32.totalorder %s21, 0
      %p134 = por %p132, %p133
      %p135 = scmp.ne.s32.totalorder %s121, %s122
      %p136 = scmp.eq.s32.totalorder %s22, 1
      %p137 = por %p135, %p136
      %p139 = scmp.ne.s32.totalorder %s122, %s138
      %p140 = scmp.eq.s32.totalorder %s22, 0
      %p141 = por %p139, %p140
      %p142 = scmp.le.s32.totalorder 1, %s16
      %p143 = scmp.lt.s32.totalorder %s16, 3
      %p144 = pnand %p142, %p143
      %p145 = pneg %p144
      // Predicated region
      $region9: #{tpu_custom_call.1} parent=5 // pred_check
        _
      $region10: #{tpu_custom_call.1} parent=5 // pred_check_branch
        %147 = sbr.rel (%p144) target = $region12
      $region11: #{tpu_custom_call.1} parent=5 // pred_region
        %s148 = ssub.s32 %s16, 1
        // Predicated region
        $region13: #{tpu_custom_call.1} parent=11 // pred_check
          %p149 = pneg %p54
        $region14: #{tpu_custom_call.1} parent=11 // pred_check_branch
          %151 = sbr.rel (%p149) target = $region16
        $region15: #{tpu_custom_call.1} parent=11 // pred_region
          %s153 = ssub.s32 128, 128
          %154 = vsyncadd [#allocation3], %s153
          %s155 = smul.addr %s25, 8
          %s156 = smul.addr %s155, 16
          %s157 = scalar_lea.hbm %s0, %s156
          %s159 = sshll.u32 [#allocation2], 4
          %s160 = int_to_ptr.vmem [resolvable:$true] %s159
          %162 = dma.hbm_to_vmem [thread:$0]  %s157, 128, %s160, [#allocation3]
        $region16: #{tpu_custom_call.1} parent=11 // pred_fallthru
          _
      $region12: #{tpu_custom_call.1} parent=5 // pred_fallthru
        _
      %p163 = scmp.lt.s32.totalorder %s16, 2
      // Predicated region
      $region17: #{tpu_custom_call.1} parent=5 // pred_check
        %p164 = pneg %p163
      $region18: #{tpu_custom_call.1} parent=5 // pred_check_branch
        %166 = sbr.rel (%p164) target = $region20
      $region19: #{tpu_custom_call.1} parent=5 // pred_region
        // Predicated region
        $region21: #{tpu_custom_call.1} parent=19 // pred_check
          %p167 = pneg %p74
        $region22: #{tpu_custom_call.1} parent=19 // pred_check_branch
          %169 = sbr.rel (%p167) target = $region24
        $region23: #{tpu_custom_call.1} parent=19 // pred_region
          %s170 = sand.u32 %s16, 1
          %s171 = scalar_lea.sflag [#allocation6], %s170
          %s172 = sand.u32 %s64, 1
          %s173 = smul.addr %s172, 1024
          %s174 = scalar_lea.vmem [#allocation5], %s173
          %s175 = smul.u32 2, %s24
          %s177 = ssub.s32 16384, 16384
          %178 = vsyncadd %s171, %s177
          %s179 = smul.addr %s175, 64
          %s180 = scalar_lea.hbm %s1, %s179
          %s181 = sshll.u32 %s174, 4
          %s182 = int_to_ptr.vmem [resolvable:$true] %s181
          %187 = dma.hbm_to_vmem [thread:$0]  %s180, 16384, %s182, %s171, 256, 128, 8
        $region24: #{tpu_custom_call.1} parent=19 // pred_fallthru
          _
        // Predicated region
        $region25: #{tpu_custom_call.1} parent=19 // pred_check
          %p188 = pneg %p100
        $region26: #{tpu_custom_call.1} parent=19 // pred_check_branch
          %190 = sbr.rel (%p188) target = $region28
        $region27: #{tpu_custom_call.1} parent=19 // pred_region
          %s191 = sand.u32 %s16, 1
          %s192 = scalar_lea.sflag [#allocation6], %s191
          %s193 = sand.u32 %s90, 1
          %s194 = smul.addr %s193, 2
          %s195 = scalar_lea.vmem [#allocation7], %s194
          %s196 = smul.u32 2, %s24
          %s198 = ssub.s32 32, 32
          %199 = vsyncadd %s192, %s198
          %s200 = smul.addr %s196, 16
          %s201 = scalar_lea.hbm %s2, %s200
          %s203 = sshll.u32 %s195, 4
          %s204 = int_to_ptr.vmem [resolvable:$true] %s203
          %206 = dma.hbm_to_vmem [thread:$0]  %s201, 32, %s204, %s192
        $region28: #{tpu_custom_call.1} parent=19 // pred_fallthru
          _
      $region20: #{tpu_custom_call.1} parent=5 // pred_fallthru
        _
      %p207 = scmp.le.s32.totalorder 1, %s16
      %p208 = scmp.lt.s32.totalorder %s16, 3
      %p209 = pnand %p207, %p208
      %p210 = pneg %p209
      // Predicated region
      $region29: #{tpu_custom_call.1} parent=5 // pred_check
        _
      $region30: #{tpu_custom_call.1} parent=5 // pred_check_branch
        %212 = sbr.rel (%p209) target = $region32
      $region31: #{tpu_custom_call.1} parent=5 // pred_region
        %s213 = ssub.s32 %s16, 1
        // Predicated region
        $region33: #{tpu_custom_call.1} parent=31 // pred_check
          %p214 = pneg %p54
        $region34: #{tpu_custom_call.1} parent=31 // pred_check_branch
          %216 = sbr.rel (%p214) target = $region36
        $region35: #{tpu_custom_call.1} parent=31 // pred_region
          %217 = dma.done [#allocation3], 128
        $region36: #{tpu_custom_call.1} parent=31 // pred_fallthru
          _
        %s218 = sand.u32 %s21, 1
        %s219 = scalar_lea.sflag [#allocation6], %s218
        %s220 = sand.u32 %s67, 1
        %s221 = smul.addr %s220, 1024
        %s222 = scalar_lea.vmem [#allocation5], %s221
        // Predicated region
        $region37: #{tpu_custom_call.1} parent=31 // pred_check
          %p223 = pneg %p80
        $region38: #{tpu_custom_call.1} parent=31 // pred_check_branch
          %225 = sbr.rel (%p223) target = $region40
        $region39: #{tpu_custom_call.1} parent=31 // pred_region
          %226 = dma.done %s219, 16384
        $region40: #{tpu_custom_call.1} parent=31 // pred_fallthru
          _
        %s227 = sand.u32 %s21, 1
        %s228 = scalar_lea.sflag [#allocation6], %s227
        %s229 = sand.u32 %s93, 1
        %s230 = smul.addr %s229, 2
        %s231 = scalar_lea.vmem [#allocation7], %s230
        // Predicated region
        $region41: #{tpu_custom_call.1} parent=31 // pred_check
          %p232 = pneg %p106
        $region42: #{tpu_custom_call.1} parent=31 // pred_check_branch
          %234 = sbr.rel (%p232) target = $region44
        $region43: #{tpu_custom_call.1} parent=31 // pred_region
          %235 = dma.done %s228, 32
        $region44: #{tpu_custom_call.1} parent=31 // pred_fallthru
          _
        %p236 = pneg %p54
        %p237 = pneg %p51
        %s238 = sand.u32 %s21, 1
        %s239 = scalar_lea.sflag [#allocation6], %s238
        %s240 = sand.u32 %s67, 1
        %s241 = smul.addr %s240, 1024
        %s242 = scalar_lea.vmem [#allocation5], %s241
        %p243 = pneg %p80
        %p244 = pneg %p77
        %s245 = sand.u32 %s21, 1
        %s246 = scalar_lea.sflag [#allocation6], %s245
        %s247 = sand.u32 %s93, 1
        %s248 = smul.addr %s247, 2
        %s249 = scalar_lea.vmem [#allocation7], %s248
        %p250 = pneg %p106
        %p251 = pneg %p103
        %p252 = pneg %p134
        %p253 = pneg %p131
        %s254 = sand.u32 %s121, 1
        %s255 = scalar_lea.sflag [#allocation4], %s254
        %s256 = sand.u32 %s121, 1
        %s257 = smul.addr %s256, 4
        %s258 = scalar_lea.vmem [#allocation8], %s257
        %s259 = smul.u32 2, %s26
        %s260 = smul.u32 2, %s26
        %s261 = smul.u32 2, %s26
        %v262 = vld [vmem:[#allocation2] sm:$0xff]
        %v263 = vld [vmem:[%s222] sm:$0xff]
        %v264 = vld [vmem:[%s222 + $0x8] sm:$0xff]
        %v265 = vld [vmem:[%s222 + $0x10] sm:$0xff]
        %v266 = vld [vmem:[%s222 + $0x18] sm:$0xff]
        %v267 = vld [vmem:[%s222 + $0x20] sm:$0xff]
        %v268 = vld [vmem:[%s222 + $0x28] sm:$0xff]
        %v269 = vld [vmem:[%s222 + $0x30] sm:$0xff]
        %v270 = vld [vmem:[%s222 + $0x38] sm:$0xff]
        %v271 = vld [vmem:[%s222 + $0x40] sm:$0xff]
        %v272 = vld [vmem:[%s222 + $0x48] sm:$0xff]
        %v273 = vld [vmem:[%s222 + $0x50] sm:$0xff]
        %v274 = vld [vmem:[%s222 + $0x58] sm:$0xff]
        %v275 = vld [vmem:[%s222 + $0x60] sm:$0xff]
        %v276 = vld [vmem:[%s222 + $0x68] sm:$0xff]
        %v277 = vld [vmem:[%s222 + $0x70] sm:$0xff]
        %v278 = vld [vmem:[%s222 + $0x78] sm:$0xff]
        %v279 = vld [vmem:[%s222 + $0x80] sm:$0xff]
        %v280 = vld [vmem:[%s222 + $0x88] sm:$0xff]
        %v281 = vld [vmem:[%s222 + $0x90] sm:$0xff]
        %v282 = vld [vmem:[%s222 + $0x98] sm:$0xff]
        %v283 = vld [vmem:[%s222 + $0xa0] sm:$0xff]
        %v284 = vld [vmem:[%s222 + $0xa8] sm:$0xff]
        %v285 = vld [vmem:[%s222 + $0xb0] sm:$0xff]
        %v286 = vld [vmem:[%s222 + $0xb8] sm:$0xff]
        %v287 = vld [vmem:[%s222 + $0xc0] sm:$0xff]
        %v288 = vld [vmem:[%s222 + $0xc8] sm:$0xff]
        %v289 = vld [vmem:[%s222 + $0xd0] sm:$0xff]
        %v290 = vld [vmem:[%s222 + $0xd8] sm:$0xff]
        %v291 = vld [vmem:[%s222 + $0xe0] sm:$0xff]
        %v292 = vld [vmem:[%s222 + $0xe8] sm:$0xff]
        %v293 = vld [vmem:[%s222 + $0xf0] sm:$0xff]
        %v294 = vld [vmem:[%s222 + $0xf8] sm:$0xff]
        %v295 = vld [vmem:[%s222 + $0x100] sm:$0xff]
        %v296 = vld [vmem:[%s222 + $0x108] sm:$0xff]
        %v297 = vld [vmem:[%s222 + $0x110] sm:$0xff]
        %v298 = vld [vmem:[%s222 + $0x118] sm:$0xff]
        %v299 = vld [vmem:[%s222 + $0x120] sm:$0xff]
        %v300 = vld [vmem:[%s222 + $0x128] sm:$0xff]
        %v301 = vld [vmem:[%s222 + $0x130] sm:$0xff]
        %v302 = vld [vmem:[%s222 + $0x138] sm:$0xff]
        %v303 = vld [vmem:[%s222 + $0x140] sm:$0xff]
        %v304 = vld [vmem:[%s222 + $0x148] sm:$0xff]
        %v305 = vld [vmem:[%s222 + $0x150] sm:$0xff]
        %v306 = vld [vmem:[%s222 + $0x158] sm:$0xff]
        %v307 = vld [vmem:[%s222 + $0x160] sm:$0xff]
        %v308 = vld [vmem:[%s222 + $0x168] sm:$0xff]
        %v309 = vld [vmem:[%s222 + $0x170] sm:$0xff]
        %v310 = vld [vmem:[%s222 + $0x178] sm:$0xff]
        %v311 = vld [vmem:[%s222 + $0x180] sm:$0xff]
        %v312 = vld [vmem:[%s222 + $0x188] sm:$0xff]
        %v313 = vld [vmem:[%s222 + $0x190] sm:$0xff]
        %v314 = vld [vmem:[%s222 + $0x198] sm:$0xff]
        %v315 = vld [vmem:[%s222 + $0x1a0] sm:$0xff]
        %v316 = vld [vmem:[%s222 + $0x1a8] sm:$0xff]
        %v317 = vld [vmem:[%s222 + $0x1b0] sm:$0xff]
        %v318 = vld [vmem:[%s222 + $0x1b8] sm:$0xff]
        %v319 = vld [vmem:[%s222 + $0x1c0] sm:$0xff]
        %v320 = vld [vmem:[%s222 + $0x1c8] sm:$0xff]
        %v321 = vld [vmem:[%s222 + $0x1d0] sm:$0xff]
        %v322 = vld [vmem:[%s222 + $0x1d8] sm:$0xff]
        %v323 = vld [vmem:[%s222 + $0x1e0] sm:$0xff]
        %v324 = vld [vmem:[%s222 + $0x1e8] sm:$0xff]
        %v325 = vld [vmem:[%s222 + $0x1f0] sm:$0xff]
        %v326 = vld [vmem:[%s222 + $0x1f8] sm:$0xff]
        %v327 = vld [vmem:[%s222 + $0x200] sm:$0xff]
        %v328 = vld [vmem:[%s222 + $0x208] sm:$0xff]
        %v329 = vld [vmem:[%s222 + $0x210] sm:$0xff]
        %v330 = vld [vmem:[%s222 + $0x218] sm:$0xff]
        %v331 = vld [vmem:[%s222 + $0x220] sm:$0xff]
        %v332 = vld [vmem:[%s222 + $0x228] sm:$0xff]
        %v333 = vld [vmem:[%s222 + $0x230] sm:$0xff]
        %v334 = vld [vmem:[%s222 + $0x238] sm:$0xff]
        %v335 = vld [vmem:[%s222 + $0x240] sm:$0xff]
        %v336 = vld [vmem:[%s222 + $0x248] sm:$0xff]
        %v337 = vld [vmem:[%s222 + $0x250] sm:$0xff]
        %v338 = vld [vmem:[%s222 + $0x258] sm:$0xff]
        %v339 = vld [vmem:[%s222 + $0x260] sm:$0xff]
        %v340 = vld [vmem:[%s222 + $0x268] sm:$0xff]
        %v341 = vld [vmem:[%s222 + $0x270] sm:$0xff]
        %v342 = vld [vmem:[%s222 + $0x278] sm:$0xff]
        %v343 = vld [vmem:[%s222 + $0x280] sm:$0xff]
        %v344 = vld [vmem:[%s222 + $0x288] sm:$0xff]
        %v345 = vld [vmem:[%s222 + $0x290] sm:$0xff]
        %v346 = vld [vmem:[%s222 + $0x298] sm:$0xff]
        %v347 = vld [vmem:[%s222 + $0x2a0] sm:$0xff]
        %v348 = vld [vmem:[%s222 + $0x2a8] sm:$0xff]
        %v349 = vld [vmem:[%s222 + $0x2b0] sm:$0xff]
        %v350 = vld [vmem:[%s222 + $0x2b8] sm:$0xff]
        %v351 = vld [vmem:[%s222 + $0x2c0] sm:$0xff]
        %v352 = vld [vmem:[%s222 + $0x2c8] sm:$0xff]
        %v353 = vld [vmem:[%s222 + $0x2d0] sm:$0xff]
        %v354 = vld [vmem:[%s222 + $0x2d8] sm:$0xff]
        %v355 = vld [vmem:[%s222 + $0x2e0] sm:$0xff]
        %v356 = vld [vmem:[%s222 + $0x2e8] sm:$0xff]
        %v357 = vld [vmem:[%s222 + $0x2f0] sm:$0xff]
        %v358 = vld [vmem:[%s222 + $0x2f8] sm:$0xff]
        %v359 = vld [vmem:[%s222 + $0x300] sm:$0xff]
        %v360 = vld [vmem:[%s222 + $0x308] sm:$0xff]
        %v361 = vld [vmem:[%s222 + $0x310] sm:$0xff]
        %v362 = vld [vmem:[%s222 + $0x318] sm:$0xff]
        %v363 = vld [vmem:[%s222 + $0x320] sm:$0xff]
        %v364 = vld [vmem:[%s222 + $0x328] sm:$0xff]
        %v365 = vld [vmem:[%s222 + $0x330] sm:$0xff]
        %v366 = vld [vmem:[%s222 + $0x338] sm:$0xff]
        %v367 = vld [vmem:[%s222 + $0x340] sm:$0xff]
        %v368 = vld [vmem:[%s222 + $0x348] sm:$0xff]
        %v369 = vld [vmem:[%s222 + $0x350] sm:$0xff]
        %v370 = vld [vmem:[%s222 + $0x358] sm:$0xff]
        %v371 = vld [vmem:[%s222 + $0x360] sm:$0xff]
        %v372 = vld [vmem:[%s222 + $0x368] sm:$0xff]
        %v373 = vld [vmem:[%s222 + $0x370] sm:$0xff]
        %v374 = vld [vmem:[%s222 + $0x378] sm:$0xff]
        %v375 = vld [vmem:[%s222 + $0x380] sm:$0xff]
        %v376 = vld [vmem:[%s222 + $0x388] sm:$0xff]
        %v377 = vld [vmem:[%s222 + $0x390] sm:$0xff]
        %v378 = vld [vmem:[%s222 + $0x398] sm:$0xff]
        %v379 = vld [vmem:[%s222 + $0x3a0] sm:$0xff]
        %v380 = vld [vmem:[%s222 + $0x3a8] sm:$0xff]
        %v381 = vld [vmem:[%s222 + $0x3b0] sm:$0xff]
        %v382 = vld [vmem:[%s222 + $0x3b8] sm:$0xff]
        %v383 = vld [vmem:[%s222 + $0x3c0] sm:$0xff]
        %v384 = vld [vmem:[%s222 + $0x3c8] sm:$0xff]
        %v385 = vld [vmem:[%s222 + $0x3d0] sm:$0xff]
        %v386 = vld [vmem:[%s222 + $0x3d8] sm:$0xff]
        %v387 = vld [vmem:[%s222 + $0x3e0] sm:$0xff]
        %v388 = vld [vmem:[%s222 + $0x3e8] sm:$0xff]
        %v389 = vld [vmem:[%s222 + $0x3f0] sm:$0xff]
        %v390 = vld [vmem:[%s222 + $0x3f8] sm:$0xff]
        %v391 = vld [vmem:[%s231] sm:$0x3]
        %v393 = vlaneseq
        %v394 = vshrl.u32 %v393, 7
        %v395 = vsub.s32 0, %v394
        %v396 = vrot.slane %v391, %v395
        %v397 = vlaneseq
        %v398 = vshrl.u32 %v397, 7
        %v399 = vsub.s32 1, %v398
        %v400 = vrot.slane %v391, %v399
        %v404 = vcombine.high %v262, %v262
        %v406 = vunpack.c.l.s4 1966171168
        %v407 = vunpack.c.0.s8 %v406
        %v408 = vlaneseq
        %v409 = vshrl.u32 %v408, 7
        %v410 = vsub.s32 %v407, %v409
        %v411 = vrot.slane %v262, %v410
        %v413 = vunpack.c.l.s4 1966171168
        %v414 = vunpack.c.0.s8 %v413
        %v415 = vlaneseq
        %v416 = vshrl.u32 %v415, 7
        %v417 = vsub.s32 %v414, %v416
        %v418 = vrot.slane %v404, %v417
        %v419 = vcombine.high %v411, %v411
        %v420 = vcombine.high %v418, %v418
        %v422 = vunpack.c.l.s4 1966171168
        %v423 = vunpack.c.0.s8 %v422
        %v424 = vlaneseq
        %v425 = vshrl.u32 %v424, 7
        %v426 = vsub.s32 %v423, %v425
        %v427 = vrot.slane %v411, %v426
        %v429 = vunpack.c.l.s4 1966171168
        %v430 = vunpack.c.0.s8 %v429
        %v431 = vlaneseq
        %v432 = vshrl.u32 %v431, 7
        %v433 = vsub.s32 %v430, %v432
        %v434 = vrot.slane %v418, %v433
        %v436 = vunpack.c.l.s4 1966171168
        %v437 = vunpack.c.0.s8 %v436
        %v438 = vlaneseq
        %v439 = vshrl.u32 %v438, 7
        %v440 = vsub.s32 %v437, %v439
        %v441 = vrot.slane %v419, %v440
        %v443 = vunpack.c.l.s4 1966171168
        %v444 = vunpack.c.0.s8 %v443
        %v445 = vlaneseq
        %v446 = vshrl.u32 %v445, 7
        %v447 = vsub.s32 %v444, %v446
        %v448 = vrot.slane %v420, %v447
        %v449 = vcombine.high %v427, %v427
        %v450 = vcombine.high %v434, %v434
        %v451 = vcombine.high %v441, %v441
        %v452 = vcombine.high %v448, %v448
        %v589 = vunpack.c.l.b16 %v263
        %v590 = vunpack.c.h.b16 %v263
        %v591 = vunpack.c.l.b16 %v264
        %v592 = vunpack.c.h.b16 %v264
        %v593 = vunpack.c.l.b16 %v265
        %v594 = vunpack.c.h.b16 %v265
        %v595 = vunpack.c.l.b16 %v266
        %v596 = vunpack.c.h.b16 %v266
        %v597 = vunpack.c.l.b16 %v267
        %v598 = vunpack.c.h.b16 %v267
        %v599 = vunpack.c.l.b16 %v268
        %v600 = vunpack.c.h.b16 %v268
        %v601 = vunpack.c.l.b16 %v269
        %v602 = vunpack.c.h.b16 %v269
        %v603 = vunpack.c.l.b16 %v270
        %v604 = vunpack.c.h.b16 %v270
        %v605 = vunpack.c.l.b16 %v271
        %v606 = vunpack.c.h.b16 %v271
        %v607 = vunpack.c.l.b16 %v272
        %v608 = vunpack.c.h.b16 %v272
        %v609 = vunpack.c.l.b16 %v273
        %v610 = vunpack.c.h.b16 %v273
        %v611 = vunpack.c.l.b16 %v274
        %v612 = vunpack.c.h.b16 %v274
        %v613 = vunpack.c.l.b16 %v275
        %v614 = vunpack.c.h.b16 %v275
        %v615 = vunpack.c.l.b16 %v276
        %v616 = vunpack.c.h.b16 %v276
        %v617 = vunpack.c.l.b16 %v277
        %v618 = vunpack.c.h.b16 %v277
        %v619 = vunpack.c.l.b16 %v278
        %v620 = vunpack.c.h.b16 %v278
        %v621 = vunpack.c.l.b16 %v279
        %v622 = vunpack.c.h.b16 %v279
        %v623 = vunpack.c.l.b16 %v280
        %v624 = vunpack.c.h.b16 %v280
        %v625 = vunpack.c.l.b16 %v281
        %v626 = vunpack.c.h.b16 %v281
        %v627 = vunpack.c.l.b16 %v282
        %v628 = vunpack.c.h.b16 %v282
        %v629 = vunpack.c.l.b16 %v283
        %v630 = vunpack.c.h.b16 %v283
        %v631 = vunpack.c.l.b16 %v284
        %v632 = vunpack.c.h.b16 %v284
        %v633 = vunpack.c.l.b16 %v285
        %v634 = vunpack.c.h.b16 %v285
        %v635 = vunpack.c.l.b16 %v286
        %v636 = vunpack.c.h.b16 %v286
        %v637 = vunpack.c.l.b16 %v287
        %v638 = vunpack.c.h.b16 %v287
        %v639 = vunpack.c.l.b16 %v288
        %v640 = vunpack.c.h.b16 %v288
        %v641 = vunpack.c.l.b16 %v289
        %v642 = vunpack.c.h.b16 %v289
        %v643 = vunpack.c.l.b16 %v290
        %v644 = vunpack.c.h.b16 %v290
        %v645 = vunpack.c.l.b16 %v291
        %v646 = vunpack.c.h.b16 %v291
        %v647 = vunpack.c.l.b16 %v292
        %v648 = vunpack.c.h.b16 %v292
        %v649 = vunpack.c.l.b16 %v293
        %v650 = vunpack.c.h.b16 %v293
        %v651 = vunpack.c.l.b16 %v294
        %v652 = vunpack.c.h.b16 %v294
        %v653 = vunpack.c.l.b16 %v295
        %v654 = vunpack.c.h.b16 %v295
        %v655 = vunpack.c.l.b16 %v296
        %v656 = vunpack.c.h.b16 %v296
        %v657 = vunpack.c.l.b16 %v297
        %v658 = vunpack.c.h.b16 %v297
        %v659 = vunpack.c.l.b16 %v298
        %v660 = vunpack.c.h.b16 %v298
        %v661 = vunpack.c.l.b16 %v299
        %v662 = vunpack.c.h.b16 %v299
        %v663 = vunpack.c.l.b16 %v300
        %v664 = vunpack.c.h.b16 %v300
        %v665 = vunpack.c.l.b16 %v301
        %v666 = vunpack.c.h.b16 %v301
        %v667 = vunpack.c.l.b16 %v302
        %v668 = vunpack.c.h.b16 %v302
        %v669 = vunpack.c.l.b16 %v303
        %v670 = vunpack.c.h.b16 %v303
        %v671 = vunpack.c.l.b16 %v304
        %v672 = vunpack.c.h.b16 %v304
        %v673 = vunpack.c.l.b16 %v305
        %v674 = vunpack.c.h.b16 %v305
        %v675 = vunpack.c.l.b16 %v306
        %v676 = vunpack.c.h.b16 %v306
        %v677 = vunpack.c.l.b16 %v307
        %v678 = vunpack.c.h.b16 %v307
        %v679 = vunpack.c.l.b16 %v308
        %v680 = vunpack.c.h.b16 %v308
        %v681 = vunpack.c.l.b16 %v309
        %v682 = vunpack.c.h.b16 %v309
        %v683 = vunpack.c.l.b16 %v310
        %v684 = vunpack.c.h.b16 %v310
        %v685 = vunpack.c.l.b16 %v311
        %v686 = vunpack.c.h.b16 %v311
        %v687 = vunpack.c.l.b16 %v312
        %v688 = vunpack.c.h.b16 %v312
        %v689 = vunpack.c.l.b16 %v313
        %v690 = vunpack.c.h.b16 %v313
        %v691 = vunpack.c.l.b16 %v314
        %v692 = vunpack.c.h.b16 %v314
        %v693 = vunpack.c.l.b16 %v315
        %v694 = vunpack.c.h.b16 %v315
        %v695 = vunpack.c.l.b16 %v316
        %v696 = vunpack.c.h.b16 %v316
        %v697 = vunpack.c.l.b16 %v317
        %v698 = vunpack.c.h.b16 %v317
        %v699 = vunpack.c.l.b16 %v318
        %v700 = vunpack.c.h.b16 %v318
        %v701 = vunpack.c.l.b16 %v319
        %v702 = vunpack.c.h.b16 %v319
        %v703 = vunpack.c.l.b16 %v320
        %v704 = vunpack.c.h.b16 %v320
        %v705 = vunpack.c.l.b16 %v321
        %v706 = vunpack.c.h.b16 %v321
        %v707 = vunpack.c.l.b16 %v322
        %v708 = vunpack.c.h.b16 %v322
        %v709 = vunpack.c.l.b16 %v323
        %v710 = vunpack.c.h.b16 %v323
        %v711 = vunpack.c.l.b16 %v324
        %v712 = vunpack.c.h.b16 %v324
        %v713 = vunpack.c.l.b16 %v325
        %v714 = vunpack.c.h.b16 %v325
        %v715 = vunpack.c.l.b16 %v326
        %v716 = vunpack.c.h.b16 %v326
        %v717 = vunpack.c.l.b16 %v327
        %v718 = vunpack.c.h.b16 %v327
        %v719 = vunpack.c.l.b16 %v328
        %v720 = vunpack.c.h.b16 %v328
        %v721 = vunpack.c.l.b16 %v329
        %v722 = vunpack.c.h.b16 %v329
        %v723 = vunpack.c.l.b16 %v330
        %v724 = vunpack.c.h.b16 %v330
        %v725 = vunpack.c.l.b16 %v331
        %v726 = vunpack.c.h.b16 %v331
        %v727 = vunpack.c.l.b16 %v332
        %v728 = vunpack.c.h.b16 %v332
        %v729 = vunpack.c.l.b16 %v333
        %v730 = vunpack.c.h.b16 %v333
        %v731 = vunpack.c.l.b16 %v334
        %v732 = vunpack.c.h.b16 %v334
        %v733 = vunpack.c.l.b16 %v335
        %v734 = vunpack.c.h.b16 %v335
        %v735 = vunpack.c.l.b16 %v336
        %v736 = vunpack.c.h.b16 %v336
        %v737 = vunpack.c.l.b16 %v337
        %v738 = vunpack.c.h.b16 %v337
        %v739 = vunpack.c.l.b16 %v338
        %v740 = vunpack.c.h.b16 %v338
        %v741 = vunpack.c.l.b16 %v339
        %v742 = vunpack.c.h.b16 %v339
        %v743 = vunpack.c.l.b16 %v340
        %v744 = vunpack.c.h.b16 %v340
        %v745 = vunpack.c.l.b16 %v341
        %v746 = vunpack.c.h.b16 %v341
        %v747 = vunpack.c.l.b16 %v342
        %v748 = vunpack.c.h.b16 %v342
        %v749 = vunpack.c.l.b16 %v343
        %v750 = vunpack.c.h.b16 %v343
        %v751 = vunpack.c.l.b16 %v344
        %v752 = vunpack.c.h.b16 %v344
        %v753 = vunpack.c.l.b16 %v345
        %v754 = vunpack.c.h.b16 %v345
        %v755 = vunpack.c.l.b16 %v346
        %v756 = vunpack.c.h.b16 %v346
        %v757 = vunpack.c.l.b16 %v347
        %v758 = vunpack.c.h.b16 %v347
        %v759 = vunpack.c.l.b16 %v348
        %v760 = vunpack.c.h.b16 %v348
        %v761 = vunpack.c.l.b16 %v349
        %v762 = vunpack.c.h.b16 %v349
        %v763 = vunpack.c.l.b16 %v350
        %v764 = vunpack.c.h.b16 %v350
        %v765 = vunpack.c.l.b16 %v351
        %v766 = vunpack.c.h.b16 %v351
        %v767 = vunpack.c.l.b16 %v352
        %v768 = vunpack.c.h.b16 %v352
        %v769 = vunpack.c.l.b16 %v353
        %v770 = vunpack.c.h.b16 %v353
        %v771 = vunpack.c.l.b16 %v354
        %v772 = vunpack.c.h.b16 %v354
        %v773 = vunpack.c.l.b16 %v355
        %v774 = vunpack.c.h.b16 %v355
        %v775 = vunpack.c.l.b16 %v356
        %v776 = vunpack.c.h.b16 %v356
        %v777 = vunpack.c.l.b16 %v357
        %v778 = vunpack.c.h.b16 %v357
        %v779 = vunpack.c.l.b16 %v358
        %v780 = vunpack.c.h.b16 %v358
        %v781 = vunpack.c.l.b16 %v359
        %v782 = vunpack.c.h.b16 %v359
        %v783 = vunpack.c.l.b16 %v360
        %v784 = vunpack.c.h.b16 %v360
        %v785 = vunpack.c.l.b16 %v361
        %v786 = vunpack.c.h.b16 %v361
        %v787 = vunpack.c.l.b16 %v362
        %v788 = vunpack.c.h.b16 %v362
        %v789 = vunpack.c.l.b16 %v363
        %v790 = vunpack.c.h.b16 %v363
        %v791 = vunpack.c.l.b16 %v364
        %v792 = vunpack.c.h.b16 %v364
        %v793 = vunpack.c.l.b16 %v365
        %v794 = vunpack.c.h.b16 %v365
        %v795 = vunpack.c.l.b16 %v366
        %v796 = vunpack.c.h.b16 %v366
        %v797 = vunpack.c.l.b16 %v367
        %v798 = vunpack.c.h.b16 %v367
        %v799 = vunpack.c.l.b16 %v368
        %v800 = vunpack.c.h.b16 %v368
        %v801 = vunpack.c.l.b16 %v369
        %v802 = vunpack.c.h.b16 %v369
        %v803 = vunpack.c.l.b16 %v370
        %v804 = vunpack.c.h.b16 %v370
        %v805 = vunpack.c.l.b16 %v371
        %v806 = vunpack.c.h.b16 %v371
        %v807 = vunpack.c.l.b16 %v372
        %v808 = vunpack.c.h.b16 %v372
        %v809 = vunpack.c.l.b16 %v373
        %v810 = vunpack.c.h.b16 %v373
        %v811 = vunpack.c.l.b16 %v374
        %v812 = vunpack.c.h.b16 %v374
        %v813 = vunpack.c.l.b16 %v375
        %v814 = vunpack.c.h.b16 %v375
        %v815 = vunpack.c.l.b16 %v376
        %v816 = vunpack.c.h.b16 %v376
        %v817 = vunpack.c.l.b16 %v377
        %v818 = vunpack.c.h.b16 %v377
        %v819 = vunpack.c.l.b16 %v378
        %v820 = vunpack.c.h.b16 %v378
        %v821 = vunpack.c.l.b16 %v379
        %v822 = vunpack.c.h.b16 %v379
        %v823 = vunpack.c.l.b16 %v380
        %v824 = vunpack.c.h.b16 %v380
        %v825 = vunpack.c.l.b16 %v381
        %v826 = vunpack.c.h.b16 %v381
        %v827 = vunpack.c.l.b16 %v382
        %v828 = vunpack.c.h.b16 %v382
        %v829 = vunpack.c.l.b16 %v383
        %v830 = vunpack.c.h.b16 %v383
        %v831 = vunpack.c.l.b16 %v384
        %v832 = vunpack.c.h.b16 %v384
        %v833 = vunpack.c.l.b16 %v385
        %v834 = vunpack.c.h.b16 %v385
        %v835 = vunpack.c.l.b16 %v386
        %v836 = vunpack.c.h.b16 %v386
        %v837 = vunpack.c.l.b16 %v387
        %v838 = vunpack.c.h.b16 %v387
        %v839 = vunpack.c.l.b16 %v388
        %v840 = vunpack.c.h.b16 %v388
        %v841 = vunpack.c.l.b16 %v389
        %v842 = vunpack.c.h.b16 %v389
        %v843 = vunpack.c.l.b16 %v390
        %v844 = vunpack.c.h.b16 %v390
        %v845 = vpack.c.b16 %v591, %v589
        %v846 = vpack.c.b16 %v592, %v590
        %v847 = vpack.c.b16 %v595, %v593
        %v848 = vpack.c.b16 %v596, %v594
        %v849 = vpack.c.b16 %v599, %v597
        %v850 = vpack.c.b16 %v600, %v598
        %v851 = vpack.c.b16 %v603, %v601
        %v852 = vpack.c.b16 %v604, %v602
        %v853 = vpack.c.b16 %v607, %v605
        %v854 = vpack.c.b16 %v608, %v606
        %v855 = vpack.c.b16 %v611, %v609
        %v856 = vpack.c.b16 %v612, %v610
        %v857 = vpack.c.b16 %v615, %v613
        %v858 = vpack.c.b16 %v616, %v614
        %v859 = vpack.c.b16 %v619, %v617
        %v860 = vpack.c.b16 %v620, %v618
        %v861 = vpack.c.b16 %v623, %v621
        %v862 = vpack.c.b16 %v624, %v622
        %v863 = vpack.c.b16 %v627, %v625
        %v864 = vpack.c.b16 %v628, %v626
        %v865 = vpack.c.b16 %v631, %v629
        %v866 = vpack.c.b16 %v632, %v630
        %v867 = vpack.c.b16 %v635, %v633
        %v868 = vpack.c.b16 %v636, %v634
        %v869 = vpack.c.b16 %v639, %v637
        %v870 = vpack.c.b16 %v640, %v638
        %v871 = vpack.c.b16 %v643, %v641
        %v872 = vpack.c.b16 %v644, %v642
        %v873 = vpack.c.b16 %v647, %v645
        %v874 = vpack.c.b16 %v648, %v646
        %v875 = vpack.c.b16 %v651, %v649
        %v876 = vpack.c.b16 %v652, %v650
        %v877 = vpack.c.b16 %v655, %v653
        %v878 = vpack.c.b16 %v656, %v654
        %v879 = vpack.c.b16 %v659, %v657
        %v880 = vpack.c.b16 %v660, %v658
        %v881 = vpack.c.b16 %v663, %v661
        %v882 = vpack.c.b16 %v664, %v662
        %v883 = vpack.c.b16 %v667, %v665
        %v884 = vpack.c.b16 %v668, %v666
        %v885 = vpack.c.b16 %v671, %v669
        %v886 = vpack.c.b16 %v672, %v670
        %v887 = vpack.c.b16 %v675, %v673
        %v888 = vpack.c.b16 %v676, %v674
        %v889 = vpack.c.b16 %v679, %v677
        %v890 = vpack.c.b16 %v680, %v678
        %v891 = vpack.c.b16 %v683, %v681
        %v892 = vpack.c.b16 %v684, %v682
        %v893 = vpack.c.b16 %v687, %v685
        %v894 = vpack.c.b16 %v688, %v686
        %v895 = vpack.c.b16 %v691, %v689
        %v896 = vpack.c.b16 %v692, %v690
        %v897 = vpack.c.b16 %v695, %v693
        %v898 = vpack.c.b16 %v696, %v694
        %v899 = vpack.c.b16 %v699, %v697
        %v900 = vpack.c.b16 %v700, %v698
        %v901 = vpack.c.b16 %v703, %v701
        %v902 = vpack.c.b16 %v704, %v702
        %v903 = vpack.c.b16 %v707, %v705
        %v904 = vpack.c.b16 %v708, %v706
        %v905 = vpack.c.b16 %v711, %v709
        %v906 = vpack.c.b16 %v712, %v710
        %v907 = vpack.c.b16 %v715, %v713
        %v908 = vpack.c.b16 %v716, %v714
        %v909 = vpack.c.b16 %v719, %v717
        %v910 = vpack.c.b16 %v720, %v718
        %v911 = vpack.c.b16 %v723, %v721
        %v912 = vpack.c.b16 %v724, %v722
        %v913 = vpack.c.b16 %v727, %v725
        %v914 = vpack.c.b16 %v728, %v726
        %v915 = vpack.c.b16 %v731, %v729
        %v916 = vpack.c.b16 %v732, %v730
        %v917 = vpack.c.b16 %v735, %v733
        %v918 = vpack.c.b16 %v736, %v734
        %v919 = vpack.c.b16 %v739, %v737
        %v920 = vpack.c.b16 %v740, %v738
        %v921 = vpack.c.b16 %v743, %v741
        %v922 = vpack.c.b16 %v744, %v742
        %v923 = vpack.c.b16 %v747, %v745
        %v924 = vpack.c.b16 %v748, %v746
        %v925 = vpack.c.b16 %v751, %v749
        %v926 = vpack.c.b16 %v752, %v750
        %v927 = vpack.c.b16 %v755, %v753
        %v928 = vpack.c.b16 %v756, %v754
        %v929 = vpack.c.b16 %v759, %v757
        %v930 = vpack.c.b16 %v760, %v758
        %v931 = vpack.c.b16 %v763, %v761
        %v932 = vpack.c.b16 %v764, %v762
        %v933 = vpack.c.b16 %v767, %v765
        %v934 = vpack.c.b16 %v768, %v766
        %v935 = vpack.c.b16 %v771, %v769
        %v936 = vpack.c.b16 %v772, %v770
        %v937 = vpack.c.b16 %v775, %v773
        %v938 = vpack.c.b16 %v776, %v774
        %v939 = vpack.c.b16 %v779, %v777
        %v940 = vpack.c.b16 %v780, %v778
        %v941 = vpack.c.b16 %v783, %v781
        %v942 = vpack.c.b16 %v784, %v782
        %v943 = vpack.c.b16 %v787, %v785
        %v944 = vpack.c.b16 %v788, %v786
        %v945 = vpack.c.b16 %v791, %v789
        %v946 = vpack.c.b16 %v792, %v790
        %v947 = vpack.c.b16 %v795, %v793
        %v948 = vpack.c.b16 %v796, %v794
        %v949 = vpack.c.b16 %v799, %v797
        %v950 = vpack.c.b16 %v800, %v798
        %v951 = vpack.c.b16 %v803, %v801
        %v952 = vpack.c.b16 %v804, %v802
        %v953 = vpack.c.b16 %v807, %v805
        %v954 = vpack.c.b16 %v808, %v806
        %v955 = vpack.c.b16 %v811, %v809
        %v956 = vpack.c.b16 %v812, %v810
        %v957 = vpack.c.b16 %v815, %v813
        %v958 = vpack.c.b16 %v816, %v814
        %v959 = vpack.c.b16 %v819, %v817
        %v960 = vpack.c.b16 %v820, %v818
        %v961 = vpack.c.b16 %v823, %v821
        %v962 = vpack.c.b16 %v824, %v822
        %v963 = vpack.c.b16 %v827, %v825
        %v964 = vpack.c.b16 %v828, %v826
        %v965 = vpack.c.b16 %v831, %v829
        %v966 = vpack.c.b16 %v832, %v830
        %v967 = vpack.c.b16 %v835, %v833
        %v968 = vpack.c.b16 %v836, %v834
        %v969 = vpack.c.b16 %v839, %v837
        %v970 = vpack.c.b16 %v840, %v838
        %v971 = vpack.c.b16 %v843, %v841
        %v972 = vpack.c.b16 %v844, %v842
        %1101 = vmatprep.subr.bf16.mxu0 %v860
        %1102 = vmatpush1.bf16.msra.mxu0 %v859
        %1103 = vmatprep.subr.bf16.mxu0 %v858
        %1104 = vmatpush1.bf16.msra.mxu0 %v857
        %1105 = vmatprep.subr.bf16.mxu0 %v856
        %1106 = vmatpush1.bf16.msra.mxu0 %v855
        %1107 = vmatprep.subr.bf16.mxu0 %v854
        %1108 = vmatpush1.bf16.msra.mxu0 %v853
        %1109 = vmatprep.subr.bf16.mxu0 %v852
        %1110 = vmatpush1.bf16.msra.mxu0 %v851
        %1111 = vmatprep.subr.bf16.mxu0 %v850
        %1112 = vmatpush1.bf16.msra.mxu0 %v849
        %1113 = vmatprep.subr.bf16.mxu0 %v848
        %1114 = vmatpush1.bf16.msra.mxu0 %v847
        %1115 = vmatprep.subr.bf16.mxu0 %v846
        %1116 = vmatpush1.bf16.msra.mxu0 %v845
        %1117 = vmatprep.subr.bf16.mxu0 %v876
        %1118 = vmatpush2.bf16.msra.mxu0 %v875
        %1119 = vmatprep.subr.bf16.mxu0 %v874
        %1120 = vmatpush2.bf16.msra.mxu0 %v873
        %1121 = vmatprep.subr.bf16.mxu0 %v872
        %1122 = vmatpush2.bf16.msra.mxu0 %v871
        %1123 = vmatprep.subr.bf16.mxu0 %v870
        %1124 = vmatpush2.bf16.msra.mxu0 %v869
        %1125 = vmatprep.subr.bf16.mxu0 %v868
        %1126 = vmatpush2.bf16.msra.mxu0 %v867
        %1127 = vmatprep.subr.bf16.mxu0 %v866
        %1128 = vmatpush2.bf16.msra.mxu0 %v865
        %1129 = vmatprep.subr.bf16.mxu0 %v864
        %1130 = vmatpush2.bf16.msra.mxu0 %v863
        %1131 = vmatprep.subr.bf16.mxu0 %v862
        %1132 = vmatpush2.bf16.msra.mxu0 %v861
        %1133 = vmatprep.mubr.bf16.mxu0 %v441
        %1134 = vmatmul.mubr.bf16.gmra.mxu0 %v427
        %v1135 = vpop.f32.mrf.mxu0
        %v1136 = vadd.f32 %v396, %v1135
        %v1137 = vpop.f32.mrf.mxu0
        %v1138 = vadd.f32 %v400, %v1137
        %v1139 = vpop.f32.mrf.mxu0
        %v1140 = vpop.f32.mrf.mxu0
        %1141 = vdwg.mxu0
        %1142 = vmatprep.subr.bf16.mxu0 %v892
        %1143 = vmatpush1.bf16.msra.mxu0 %v891
        %1144 = vmatprep.subr.bf16.mxu0 %v890
        %1145 = vmatpush1.bf16.msra.mxu0 %v889
        %1146 = vmatprep.subr.bf16.mxu0 %v888
        %1147 = vmatpush1.bf16.msra.mxu0 %v887
        %1148 = vmatprep.subr.bf16.mxu0 %v886
        %1149 = vmatpush1.bf16.msra.mxu0 %v885
        %1150 = vmatprep.subr.bf16.mxu0 %v884
        %1151 = vmatpush1.bf16.msra.mxu0 %v883
        %1152 = vmatprep.subr.bf16.mxu0 %v882
        %1153 = vmatpush1.bf16.msra.mxu0 %v881
        %1154 = vmatprep.subr.bf16.mxu0 %v880
        %1155 = vmatpush1.bf16.msra.mxu0 %v879
        %1156 = vmatprep.subr.bf16.mxu0 %v878
        %1157 = vmatpush1.bf16.msra.mxu0 %v877
        %1158 = vmatprep.subr.bf16.mxu0 %v908
        %1159 = vmatpush2.bf16.msra.mxu0 %v907
        %1160 = vmatprep.subr.bf16.mxu0 %v906
        %1161 = vmatpush2.bf16.msra.mxu0 %v905
        %1162 = vmatprep.subr.bf16.mxu0 %v904
        %1163 = vmatpush2.bf16.msra.mxu0 %v903
        %1164 = vmatprep.subr.bf16.mxu0 %v902
        %1165 = vmatpush2.bf16.msra.mxu0 %v901
        %1166 = vmatprep.subr.bf16.mxu0 %v900
        %1167 = vmatpush2.bf16.msra.mxu0 %v899
        %1168 = vmatprep.subr.bf16.mxu0 %v898
        %1169 = vmatpush2.bf16.msra.mxu0 %v897
        %1170 = vmatprep.subr.bf16.mxu0 %v896
        %1171 = vmatpush2.bf16.msra.mxu0 %v895
        %1172 = vmatprep.subr.bf16.mxu0 %v894
        %1173 = vmatpush2.bf16.msra.mxu0 %v893
        %1174 = vmatprep.mubr.bf16.mxu0 %v451
        %1175 = vmatmul.mubr.bf16.gmra.mxu0 %v449
        %v1176 = vpop.f32.mrf.mxu0
        %v1177 = vadd.f32 %v1136, %v1176
        %v1178 = vpop.f32.mrf.mxu0
        %v1179 = vadd.f32 %v1138, %v1178
        %v1180 = vpop.f32.mrf.mxu0
        %v1181 = vpop.f32.mrf.mxu0
        %1182 = vdwg.mxu0
        %1183 = vmatprep.subr.bf16.mxu0 %v924
        %1184 = vmatpush1.bf16.msra.mxu0 %v923
        %1185 = vmatprep.subr.bf16.mxu0 %v922
        %1186 = vmatpush1.bf16.msra.mxu0 %v921
        %1187 = vmatprep.subr.bf16.mxu0 %v920
        %1188 = vmatpush1.bf16.msra.mxu0 %v919
        %1189 = vmatprep.subr.bf16.mxu0 %v918
        %1190 = vmatpush1.bf16.msra.mxu0 %v917
        %1191 = vmatprep.subr.bf16.mxu0 %v916
        %1192 = vmatpush1.bf16.msra.mxu0 %v915
        %1193 = vmatprep.subr.bf16.mxu0 %v914
        %1194 = vmatpush1.bf16.msra.mxu0 %v913
        %1195 = vmatprep.subr.bf16.mxu0 %v912
        %1196 = vmatpush1.bf16.msra.mxu0 %v911
        %1197 = vmatprep.subr.bf16.mxu0 %v910
        %1198 = vmatpush1.bf16.msra.mxu0 %v909
        %1199 = vmatprep.subr.bf16.mxu0 %v940
        %1200 = vmatpush2.bf16.msra.mxu0 %v939
        %1201 = vmatprep.subr.bf16.mxu0 %v938
        %1202 = vmatpush2.bf16.msra.mxu0 %v937
        %1203 = vmatprep.subr.bf16.mxu0 %v936
        %1204 = vmatpush2.bf16.msra.mxu0 %v935
        %1205 = vmatprep.subr.bf16.mxu0 %v934
        %1206 = vmatpush2.bf16.msra.mxu0 %v933
        %1207 = vmatprep.subr.bf16.mxu0 %v932
        %1208 = vmatpush2.bf16.msra.mxu0 %v931
        %1209 = vmatprep.subr.bf16.mxu0 %v930
        %1210 = vmatpush2.bf16.msra.mxu0 %v929
        %1211 = vmatprep.subr.bf16.mxu0 %v928
        %1212 = vmatpush2.bf16.msra.mxu0 %v927
        %1213 = vmatprep.subr.bf16.mxu0 %v926
        %1214 = vmatpush2.bf16.msra.mxu0 %v925
        %1215 = vmatprep.mubr.bf16.mxu0 %v448
        %1216 = vmatmul.mubr.bf16.gmra.mxu0 %v434
        %v1217 = vpop.f32.mrf.mxu0
        %v1218 = vadd.f32 %v1177, %v1217
        %v1219 = vpop.f32.mrf.mxu0
        %v1220 = vadd.f32 %v1179, %v1219
        %v1221 = vpop.f32.mrf.mxu0
        %v1222 = vpop.f32.mrf.mxu0
        %1223 = vdwg.mxu0
        %1224 = vmatprep.subr.bf16.mxu0 %v956
        %1225 = vmatpush1.bf16.msra.mxu0 %v955
        %1226 = vmatprep.subr.bf16.mxu0 %v954
        %1227 = vmatpush1.bf16.msra.mxu0 %v953
        %1228 = vmatprep.subr.bf16.mxu0 %v952
        %1229 = vmatpush1.bf16.msra.mxu0 %v951
        %1230 = vmatprep.subr.bf16.mxu0 %v950
        %1231 = vmatpush1.bf16.msra.mxu0 %v949
        %1232 = vmatprep.subr.bf16.mxu0 %v948
        %1233 = vmatpush1.bf16.msra.mxu0 %v947
        %1234 = vmatprep.subr.bf16.mxu0 %v946
        %1235 = vmatpush1.bf16.msra.mxu0 %v945
        %1236 = vmatprep.subr.bf16.mxu0 %v944
        %1237 = vmatpush1.bf16.msra.mxu0 %v943
        %1238 = vmatprep.subr.bf16.mxu0 %v942
        %1239 = vmatpush1.bf16.msra.mxu0 %v941
        %1240 = vmatprep.subr.bf16.mxu0 %v972
        %1241 = vmatpush2.bf16.msra.mxu0 %v971
        %1242 = vmatprep.subr.bf16.mxu0 %v970
        %1243 = vmatpush2.bf16.msra.mxu0 %v969
        %1244 = vmatprep.subr.bf16.mxu0 %v968
        %1245 = vmatpush2.bf16.msra.mxu0 %v967
        %1246 = vmatprep.subr.bf16.mxu0 %v966
        %1247 = vmatpush2.bf16.msra.mxu0 %v965
        %1248 = vmatprep.subr.bf16.mxu0 %v964
        %1249 = vmatpush2.bf16.msra.mxu0 %v963
        %1250 = vmatprep.subr.bf16.mxu0 %v962
        %1251 = vmatpush2.bf16.msra.mxu0 %v961
        %1252 = vmatprep.subr.bf16.mxu0 %v960
        %1253 = vmatpush2.bf16.msra.mxu0 %v959
        %1254 = vmatprep.subr.bf16.mxu0 %v958
        %1255 = vmatpush2.bf16.msra.mxu0 %v957
        %1256 = vmatprep.mubr.bf16.mxu0 %v452
        %1257 = vmatmul.mubr.bf16.gmra.mxu0 %v450
        %v1258 = vpop.f32.mrf.mxu0
        %v1259 = vadd.f32 %v1218, %v1258
        %v1260 = vpop.f32.mrf.mxu0
        %v1261 = vadd.f32 %v1220, %v1260
        %v1262 = vpop.f32.mrf.mxu0
        %v1263 = vpop.f32.mrf.mxu0
        %1264 = vdwg.mxu0
        %v1267 = vcombine.low %v1259, %v1261
        %v1269 = vunpack.c.l.s4 1983009808
        %v1270 = vunpack.c.0.s8 %v1269
        %v1271 = vlaneseq
        %v1272 = vshrl.u32 %v1271, 7
        %v1273 = vsub.s32 %v1270, %v1272
        %v1274 = vrot.slane %v1267, %v1273
        %1276 = vst [vmem:[%s258] sm:$0xf] %v1274
        %s1277 = sand.u32 %s121, 1
        %s1278 = scalar_lea.sflag [#allocation4], %s1277
        %s1279 = sand.u32 %s121, 1
        %s1280 = smul.addr %s1279, 4
        %s1281 = scalar_lea.vmem [#allocation8], %s1280
        // Predicated region
        $region45: #{tpu_custom_call.1} parent=31 // pred_check
          %p1282 = pneg %p131
        $region46: #{tpu_custom_call.1} parent=31 // pred_check_branch
          %1284 = sbr.rel (%p1282) target = $region48
        $region47: #{tpu_custom_call.1} parent=31 // pred_region
          %s1285 = smul.u32 2, %s26
          %s1287 = ssub.s32 64, 64
          %1288 = vsyncadd %s1278, %s1287
          %s1289 = smul.addr %s25, 4
          %s1290 = sadd.s32 %s1285, %s1289
          %s1291 = smul.addr %s1290, 32
          %s1292 = scalar_lea.hbm %s3, %s1291
          %s1294 = sshll.u32 %s1281, 4
          %s1295 = int_to_ptr.vmem [resolvable:$true] %s1294
          %1297 = dma.vmem_to_hbm [thread:$0]  %s1295, 64, %s1292, %s1278
        $region48: #{tpu_custom_call.1} parent=31 // pred_fallthru
          _
      $region32: #{tpu_custom_call.1} parent=5 // pred_fallthru
        _
      %p1298 = scmp.le.s32.totalorder 2, %s16
      // Predicated region
      $region49: #{tpu_custom_call.1} parent=5 // pred_check
        %p1299 = pneg %p1298
      $region50: #{tpu_custom_call.1} parent=5 // pred_check_branch
        %1301 = sbr.rel (%p1299) target = $region52
      $region51: #{tpu_custom_call.1} parent=5 // pred_region
        %s1302 = ssub.s32 %s16, 2
        // Predicated region
        $region53: #{tpu_custom_call.1} parent=51 // pred_check
          %p1303 = pneg %p137
        $region54: #{tpu_custom_call.1} parent=51 // pred_check_branch
          %1305 = sbr.rel (%p1303) target = $region56
        $region55: #{tpu_custom_call.1} parent=51 // pred_region
          %s1306 = sand.u32 %s122, 1
          %s1307 = scalar_lea.sflag [#allocation4], %s1306
          %s1308 = sand.u32 %s122, 1
          %s1309 = smul.addr %s1308, 4
          %s1310 = scalar_lea.vmem [#allocation8], %s1309
          %1311 = dma.done %s1307, 64
        $region56: #{tpu_custom_call.1} parent=51 // pred_fallthru
          _
      $region52: #{tpu_custom_call.1} parent=5 // pred_fallthru
        _
    $region6: #{tpu_custom_call.1} parent=1 // loop_footer
      %s20 = sadd.s32 1, %s16
    $region7: #{tpu_custom_call.1} parent=1 // loop_footer_branch
      %15 = sbr.rel target = $region3
    $region8: #{tpu_custom_call.1} parent=1 // loop_exit
      _
    %1312 = vsyncpa [#allocation3], 1
    %s1313 = scalar_lea.sflag [#allocation3], 1
    %1314 = vsyncpa %s1313, 1
    %1315 = vsyncpa [#allocation6], 1
    %s1316 = scalar_lea.sflag [#allocation6], 1
    %1317 = vsyncpa %s1316, 1
    %1318 = vsyncpa [#allocation4], 1
    %s1319 = scalar_lea.sflag [#allocation4], 1
    %1320 = vsyncpa %s1319, 1

</llo_original>
